<compile_context>
chip_gen: v5e
topology: v5e:2x2
jax: 0.10.0
libtpu: 0.0.40
codegen_flags: <defaults>
</compile_context>

<pallas_src>
import jax
import jax.numpy as jnp
import numpy as np
from jax.experimental import pallas as pl
from jax.experimental.pallas import tpu as pltpu


def _leaky(x):
    # torch.nn.LeakyReLU(0.1)
    return jnp.where(x >= 0, x, 0.1 * x)


# ---------------------------------------------------------------------------
# Fused Pallas kernel (whole forward pass)
# ---------------------------------------------------------------------------
def fullmodel_kernel(ph_ref, w1_ref, b1_ref, w2_ref, b2_ref,
                     wfc1_ref, bfc1_ref, wh_ref, bh_ref, o_ref):
    """Fused forward.

    ph_ref : (8*NP*B, 3)  conv1 im2col patches; row (t*NP + p')*B + b holds the
             3-tap patch for conv1 output position i = 8*p' + t of batch b.
    w1_ref : (3, C1)        b1_ref : (1, C1)
    w2_ref : (4*C1, C2)     b2_ref : (1, C2)      (im2col layout [kk*C1+ci, co])
    wfc1_ref: (NP*C2, F)    bfc1_ref: (1, F)      (rows permuted to p*C2+c; pad rows zero)
    wh_ref : (F, 128)       bh_ref : (1, 128)     (fc2 | regression, zero padded)
    o_ref  : (B, 128)
    """
    B = o_ref.shape[0]
    blk = ph_ref.shape[0] // 8        # rows per conv1-phase block = NP * B
    NP = blk // B

    ph = ph_ref[...]                  # (8*blk, 3)
    w1 = w1_ref[...]                  # (3, C1)

    # conv1 + bias: contraction depth is only 3 -> 3 VPU broadcast-FMAs (skip MXU).
    c1 = (ph[:, 0:1] * w1[0:1, :]
          + ph[:, 1:2] * w1[1:2, :]
          + ph[:, 2:3] * w1[2:3, :]) + b1_ref[...]
    c1 = _leaky(c1)                   # (8*blk, C1)

    # pool1: pool1[4p'+s] = max(relu1[8p'+2s], relu1[8p'+2s+1]) = max of phase blocks.
    s0 = jnp.maximum(c1[0 * blk:1 * blk], c1[1 * blk:2 * blk])   # pool1[4p'+0]
    s1 = jnp.maximum(c1[2 * blk:3 * blk], c1[3 * blk:4 * blk])   # pool1[4p'+1]
    s2 = jnp.maximum(c1[4 * blk:5 * blk], c1[5 * blk:6 * blk])   # pool1[4p'+2]
    s3 = jnp.maximum(c1[6 * blk:7 * blk], c1[7 * blk:8 * blk])   # pool1[4p'+3]
    # shift by one p'-block (B rows): s0n[p'] = pool1[4(p'+1)+0], s1n[p'] = pool1[4(p'+1)+1].
    # The wrapped rows land in the unused last p' slot.
    s0n = jnp.concatenate([s0[B:], s0[:B]], axis=0)
    s1n = jnp.concatenate([s1[B:], s1[:B]], axis=0)

    # conv2 im2col rows; even (j=2p') and odd (j=2p'+1) streams stacked -> one MXU dot.
    m_even = jnp.concatenate([s0, s1, s2, s3], axis=1)           # (blk, 4*C1)
    m_odd = jnp.concatenate([s2, s3, s0n, s1n], axis=1)          # (blk, 4*C1)
    m = jnp.concatenate([m_even, m_odd], axis=0)                 # (2*blk, 4*C1)

    y2 = jnp.dot(m, w2_ref[...], preferred_element_type=jnp.float32) + b2_ref[...]
    y2 = _leaky(y2)                                              # (2*blk, C2)

    # pool2: max(even, odd) -> (blk, C2), rows (p', b), channels-last.
    out2 = jnp.maximum(y2[0:blk], y2[blk:2 * blk])

    # flatten (position-major, channels-last).  The torch channel-major order is
    # folded into wfc1 host-side, so this is just a lane concatenation.
    xf = jnp.concatenate([out2[p * B:(p + 1) * B, :] for p in range(NP)], axis=1)  # (B, NP*C2)

    h = jnp.dot(xf, wfc1_ref[...], preferred_element_type=jnp.float32) + bfc1_ref[...]
    h = _leaky(h)                                                # (B, F)

    # merged lane-dense head: fc2 and regression in one 128-wide matmul.
    o_ref[...] = jnp.dot(h, wh_ref[...], preferred_element_type=jnp.float32) + bh_ref[...]


# ---------------------------------------------------------------------------
# Host-side glue (static slices/reshapes only; one-time weight re-layout)
# ---------------------------------------------------------------------------
def _shape_chain(L):
    n1 = (L - 3) // 1 + 1     # conv1 (k=3, s=1)
    n2 = (n1 - 2) // 2 + 1    # pool1 (2, 2)
    n3 = (n2 - 4) // 2 + 1    # conv2 (k=4, s=2)
    n4 = (n3 - 2) // 2 + 1    # pool2 (2, 2)
    return n1, n2, n3, n4


def _conv1_phase_patches(x, NP):
    """x: (B, 1, L) -> (8*NP*B, 3) conv1 patches, rows ordered (phase t, block p', batch b).

    Uses only pad / reshape / contiguous slices (no gather, no strided slice)."""
    B, _, L = x.shape
    xs = x[:, 0, :]
    need = 8 * NP + 8
    xs = jnp.pad(xs, ((0, 0), (0, max(need - L, 0))))[:, :need]
    a = xs[:, 0:8 * NP].reshape(B, NP, 8)          # x[8p'+q],   q=0..7
    b = xs[:, 8:8 * NP + 8].reshape(B, NP, 8)      # x[8p'+8+q], q=0..7
    sp = jnp.concatenate([a, b[:, :, 0:2]], axis=2)            # (B, NP, 10): x[8p'+q], q=0..9
    ph = jnp.stack([sp[:, :, t:t + 3] for t in range(8)], axis=0)   # (8, B, NP, 3)
    return jnp.transpose(ph, (0, 2, 1, 3)).reshape(8 * NP * B, 3)


def make_params(w1, b1, w2, b2, wfc1, bfc1, wfc2, bfc2, wreg, breg, len_input):
    """One-time re-layout of torch-shaped weights for the fused kernel."""
    c1out, c1in, k1 = w1.shape
    c2out, c2in, k2 = w2.shape
    assert (c1in, k1, k2) == (1, 3, 4) and c2in == c1out, \
        "fused kernel assumes the default conv1=(·,3,1), pool=(2,2), conv2=(·,4,2) structure"
    _, _, _, n4 = _shape_chain(len_input)
    NP = n4 + 1
    fc1_dim = wfc1.shape[0]
    n_cls, n_out = wfc2.shape[0], wreg.shape[0]
    hpad = 128 * pl.cdiv(n_cls + n_out, 128)

    # conv weights in im2col-matmul layout [k*Cin + ci, co] = w[co, ci, k]
    w1_mat = jnp.transpose(w1, (2, 1, 0)).reshape(k1 * c1in, c1out)
    w2_mat = jnp.transpose(w2, (2, 1, 0)).reshape(k2 * c2in, c2out)

    # fc1: rows reordered from torch's channel-major flatten (c*n4 + p) to the
    # kernel's position-major order (p*C2 + c); the padded p=n4 block gets zero rows.
    wfc1_perm = jnp.transpose(wfc1.T.reshape(c2out, n4, fc1_dim), (1, 0, 2))
    wfc1_eff = jnp.pad(wfc1_perm.reshape(n4 * c2out, fc1_dim), ((0, (NP - n4) * c2out), (0, 0)))

    # merged, 128-lane-padded head: [fc2 | regression | zeros]
    w_head = jnp.zeros((fc1_dim, hpad), jnp.float32)
    w_head = w_head.at[:, :n_cls].set(wfc2.T)
    w_head = w_head.at[:, n_cls:n_cls + n_out].set(wreg.T)
    b_head = jnp.zeros((1, hpad), jnp.float32)
    b_head = b_head.at[0, :n_cls].set(bfc2)
    b_head = b_head.at[0, n_cls:n_cls + n_out].set(breg)

    return dict(
        w1=w1_mat, b1=b1.reshape(1, c1out),
        w2=w2_mat, b2=b2.reshape(1, c2out),
        wfc1=wfc1_eff, bfc1=bfc1.reshape(1, fc1_dim),
        wh=w_head, bh=b_head,
        NP=NP, n_cls=n_cls, n_out=n_out,
    )


def full_model_forward(x, params):
    """x: (B, 1, L) float32 (torch NCL).  Returns (class_output, regression_output)."""
    B = x.shape[0]
    patches = _conv1_phase_patches(x, params["NP"])
    hpad = params["wh"].shape[1]

    args = (patches, params["w1"], params["b1"], params["w2"], params["b2"],
            params["wfc1"], params["bfc1"], params["wh"], params["bh"])

    out = pl.pallas_call(
        fullmodel_kernel,
        out_shape=jax.ShapeDtypeStruct((B, hpad), jnp.float32),
        grid=(1,),   # problem is <1 MiB; for large B, tile rows and mark "parallel"
        in_specs=[pl.BlockSpec(a.shape, lambda i: (0, 0)) for a in args],
        out_specs=pl.BlockSpec((B, hpad), lambda i: (0, 0)),
        compiler_params=pltpu.CompilerParams(dimension_semantics=("arbitrary",)),
    )(*args)

    n_cls, n_out = params["n_cls"], params["n_out"]
    return out[:, :n_cls], out[:, n_cls:n_cls + n_out]


# ---------------------------------------------------------------------------
# Pure-JAX reference (independent of the Pallas path) for verification
# ---------------------------------------------------------------------------
def reference_forward(x, p):
    y = jax.lax.conv_general_dilated(
        x, p["w1"], (1,), "VALID", dimension_numbers=("NCH", "OIH", "NCH"))
    y = _leaky(y + p["b1"][None, :, None])
    y = jax.lax.reduce_window(y, -jnp.inf, jax.lax.max, (1, 1, 2), (1, 1, 2), "VALID")
    y = jax.lax.conv_general_dilated(
        y, p["w2"], (2,), "VALID", dimension_numbers=("NCH", "OIH", "NCH"))
    y = _leaky(y + p["b2"][None, :, None])
    y = jax.lax.reduce_window(y, -jnp.inf, jax.lax.max, (1, 1, 2), (1, 1, 2), "VALID")
    xf = y.reshape(y.shape[0], -1)
    h = _leaky(xf @ p["wfc1"].T + p["bfc1"])
    cls = h @ p["wfc2"].T + p["bfc2"]
    reg = h @ p["wreg"].T + p["breg"]
    return cls, reg


# ---------------------------------------------------------------------------
if __name__ == "__main__":
    B, len_input = 2, 64
    fc1_dim, num_classes = 256, 3
    num_hidden, num_output = 256, 2   # forward requires num_hidden == fc1_dim

    _, _, _, n4 = _shape_chain(len_input)
    flat = n4 * 32

    key = jax.random.PRNGKey(0)
    ks = jax.random.split(key, 11)

    def init(k, shape, scale=0.05):
        return scale * jax.random.normal(k, shape, dtype=jnp.float32)

    # torch-shaped parameters (deterministic synthetic init)
    w1 = init(ks[0], (16, 1, 3));               b1 = init(ks[1], (16,))
    w2 = init(ks[2], (32, 16, 4));              b2 = init(ks[3], (32,))
    wfc1 = init(ks[4], (fc1_dim, flat));        bfc1 = init(ks[5], (fc1_dim,))
    wfc2 = init(ks[6], (num_classes, fc1_dim)); bfc2 = init(ks[7], (num_classes,))
    wreg = init(ks[8], (num_output, num_hidden)); breg = init(ks[9], (num_output,))

    x = jax.random.normal(ks[10], (B, 1, len_input), dtype=jnp.float32)

    params = make_params(w1, b1, w2, b2, wfc1, bfc1, wfc2, bfc2, wreg, breg, len_input)

    cls_out, reg_out = jax.block_until_ready(full_model_forward(x, params))

    ref_cls, ref_reg = reference_forward(
        x, dict(w1=w1, b1=b1, w2=w2, b2=b2, wfc1=wfc1, bfc1=bfc1,
                wfc2=wfc2, bfc2=bfc2, wreg=wreg, breg=breg))
    np.testing.assert_allclose(np.asarray(cls_out), np.asarray(ref_cls),
                               rtol=5e-2, atol=5e-3)
    np.testing.assert_allclose(np.asarray(reg_out), np.asarray(ref_reg),
                               rtol=5e-2, atol=5e-3)

    assert cls_out.shape == (B, num_classes) and reg_out.shape == (B, num_output)
    print("KERNEL_OK")
</pallas_src>

<mosaic_0001>
module attributes {stable_mosaic.version = 11 : i64} {
  func.func @fullmodel_kernel(%arg0: i32, %arg1: memref<128x3xf32, #tpu.memory_space<vmem>>, %arg2: memref<3x16xf32, #tpu.memory_space<vmem>>, %arg3: memref<1x16xf32, #tpu.memory_space<vmem>>, %arg4: memref<64x32xf32, #tpu.memory_space<vmem>>, %arg5: memref<1x32xf32, #tpu.memory_space<vmem>>, %arg6: memref<256x256xf32, #tpu.memory_space<vmem>>, %arg7: memref<1x256xf32, #tpu.memory_space<vmem>>, %arg8: memref<256x128xf32, #tpu.memory_space<vmem>>, %arg9: memref<1x128xf32, #tpu.memory_space<vmem>>, %arg10: memref<2x128xf32, #tpu.memory_space<vmem>>) attributes {dimension_semantics = [#tpu.dimension_semantics<arbitrary>], iteration_bounds = array<i64: 1>, scalar_prefetch = 0 : i64, scratch_operands = 0 : i64, tpu.core_type = #tpu.core_type<tc>, window_params = [{pipeline_mode = #tpu.pipeline_mode<synchronous>, transform_indices = @transform_0, window_bounds = array<i64: 128, 3>}, {pipeline_mode = #tpu.pipeline_mode<synchronous>, transform_indices = @transform_1, window_bounds = array<i64: 3, 16>}, {pipeline_mode = #tpu.pipeline_mode<synchronous>, transform_indices = @transform_2, window_bounds = array<i64: 1, 16>}, {pipeline_mode = #tpu.pipeline_mode<synchronous>, transform_indices = @transform_3, window_bounds = array<i64: 64, 32>}, {pipeline_mode = #tpu.pipeline_mode<synchronous>, transform_indices = @transform_4, window_bounds = array<i64: 1, 32>}, {pipeline_mode = #tpu.pipeline_mode<synchronous>, transform_indices = @transform_5, window_bounds = array<i64: 256, 256>}, {pipeline_mode = #tpu.pipeline_mode<synchronous>, transform_indices = @transform_6, window_bounds = array<i64: 1, 256>}, {pipeline_mode = #tpu.pipeline_mode<synchronous>, transform_indices = @transform_7, window_bounds = array<i64: 256, 128>}, {pipeline_mode = #tpu.pipeline_mode<synchronous>, transform_indices = @transform_8, window_bounds = array<i64: 1, 128>}, {pipeline_mode = #tpu.pipeline_mode<synchronous>, transform_indices = @transform_9, window_bounds = array<i64: 2, 128>}]} {
    %c0 = arith.constant 0 : index
    %c0_0 = arith.constant 0 : index
    %0 = vector.load %arg1[%c0, %c0_0] : memref<128x3xf32, #tpu.memory_space<vmem>>, vector<128x3xf32>
    %c0_1 = arith.constant 0 : index
    %c0_2 = arith.constant 0 : index
    %1 = vector.load %arg2[%c0_1, %c0_2] : memref<3x16xf32, #tpu.memory_space<vmem>>, vector<3x16xf32>
    %2 = vector.extract_strided_slice %0 {offsets = [0, 0], sizes = [128, 1], strides = [1, 1]} : vector<128x3xf32> to vector<128x1xf32>
    %3 = vector.extract_strided_slice %1 {offsets = [0, 0], sizes = [1, 16], strides = [1, 1]} : vector<3x16xf32> to vector<1x16xf32>
    %4 = vector.broadcast %2 : vector<128x1xf32> to vector<128x16xf32>
    %5 = vector.broadcast %3 : vector<1x16xf32> to vector<128x16xf32>
    %6 = arith.mulf %4, %5 : vector<128x16xf32>
    %7 = vector.extract_strided_slice %0 {offsets = [0, 1], sizes = [128, 1], strides = [1, 1]} : vector<128x3xf32> to vector<128x1xf32>
    %8 = vector.extract_strided_slice %1 {offsets = [1, 0], sizes = [1, 16], strides = [1, 1]} : vector<3x16xf32> to vector<1x16xf32>
    %9 = vector.broadcast %7 : vector<128x1xf32> to vector<128x16xf32>
    %10 = vector.broadcast %8 : vector<1x16xf32> to vector<128x16xf32>
    %11 = arith.mulf %9, %10 : vector<128x16xf32>
    %12 = arith.addf %6, %11 : vector<128x16xf32>
    %13 = vector.extract_strided_slice %0 {offsets = [0, 2], sizes = [128, 1], strides = [1, 1]} : vector<128x3xf32> to vector<128x1xf32>
    %14 = vector.extract_strided_slice %1 {offsets = [2, 0], sizes = [1, 16], strides = [1, 1]} : vector<3x16xf32> to vector<1x16xf32>
    %15 = vector.broadcast %13 : vector<128x1xf32> to vector<128x16xf32>
    %16 = vector.broadcast %14 : vector<1x16xf32> to vector<128x16xf32>
    %17 = arith.mulf %15, %16 : vector<128x16xf32>
    %18 = arith.addf %12, %17 : vector<128x16xf32>
    %c0_3 = arith.constant 0 : index
    %c0_4 = arith.constant 0 : index
    %19 = vector.load %arg3[%c0_3, %c0_4] : memref<1x16xf32, #tpu.memory_space<vmem>>, vector<1x16xf32>
    %20 = vector.broadcast %19 : vector<1x16xf32> to vector<128x16xf32>
    %21 = arith.addf %18, %20 : vector<128x16xf32>
    %cst = arith.constant 0.000000e+00 : f32
    %22 = vector.broadcast %cst : f32 to vector<128x16xf32>
    %23 = arith.cmpf oge, %21, %22 : vector<128x16xf32>
    %cst_5 = arith.constant 1.000000e-01 : f32
    %24 = vector.broadcast %cst_5 : f32 to vector<128x16xf32>
    %25 = arith.mulf %24, %21 : vector<128x16xf32>
    %26 = arith.select %23, %21, %25 : vector<128x16xi1>, vector<128x16xf32>
    %27 = vector.extract_strided_slice %26 {offsets = [0, 0], sizes = [16, 16], strides = [1, 1]} : vector<128x16xf32> to vector<16x16xf32>
    %28 = vector.extract_strided_slice %26 {offsets = [16, 0], sizes = [16, 16], strides = [1, 1]} : vector<128x16xf32> to vector<16x16xf32>
    %29 = arith.maximumf %27, %28 : vector<16x16xf32>
    %30 = vector.extract_strided_slice %26 {offsets = [32, 0], sizes = [16, 16], strides = [1, 1]} : vector<128x16xf32> to vector<16x16xf32>
    %31 = vector.extract_strided_slice %26 {offsets = [48, 0], sizes = [16, 16], strides = [1, 1]} : vector<128x16xf32> to vector<16x16xf32>
    %32 = arith.maximumf %30, %31 : vector<16x16xf32>
    %33 = vector.extract_strided_slice %26 {offsets = [64, 0], sizes = [16, 16], strides = [1, 1]} : vector<128x16xf32> to vector<16x16xf32>
    %34 = vector.extract_strided_slice %26 {offsets = [80, 0], sizes = [16, 16], strides = [1, 1]} : vector<128x16xf32> to vector<16x16xf32>
    %35 = arith.maximumf %33, %34 : vector<16x16xf32>
    %36 = vector.extract_strided_slice %26 {offsets = [96, 0], sizes = [16, 16], strides = [1, 1]} : vector<128x16xf32> to vector<16x16xf32>
    %37 = vector.extract_strided_slice %26 {offsets = [112, 0], sizes = [16, 16], strides = [1, 1]} : vector<128x16xf32> to vector<16x16xf32>
    %38 = arith.maximumf %36, %37 : vector<16x16xf32>
    %39 = vector.extract_strided_slice %29 {offsets = [2, 0], sizes = [14, 16], strides = [1, 1]} : vector<16x16xf32> to vector<14x16xf32>
    %40 = vector.extract_strided_slice %29 {offsets = [0, 0], sizes = [2, 16], strides = [1, 1]} : vector<16x16xf32> to vector<2x16xf32>
    %41 = tpu.concatenate %39, %40 in 0 : vector<14x16xf32>, vector<2x16xf32> -> vector<16x16xf32>
    %42 = vector.extract_strided_slice %32 {offsets = [2, 0], sizes = [14, 16], strides = [1, 1]} : vector<16x16xf32> to vector<14x16xf32>
    %43 = vector.extract_strided_slice %32 {offsets = [0, 0], sizes = [2, 16], strides = [1, 1]} : vector<16x16xf32> to vector<2x16xf32>
    %44 = tpu.concatenate %42, %43 in 0 : vector<14x16xf32>, vector<2x16xf32> -> vector<16x16xf32>
    %45 = tpu.concatenate %29, %32, %35, %38 in 1 : vector<16x16xf32>, vector<16x16xf32>, vector<16x16xf32>, vector<16x16xf32> -> vector<16x64xf32>
    %46 = tpu.concatenate %35, %38, %41, %44 in 1 : vector<16x16xf32>, vector<16x16xf32>, vector<16x16xf32>, vector<16x16xf32> -> vector<16x64xf32>
    %47 = tpu.concatenate %45, %46 in 0 : vector<16x64xf32>, vector<16x64xf32> -> vector<32x64xf32>
    %c0_6 = arith.constant 0 : index
    %c0_7 = arith.constant 0 : index
    %48 = vector.load %arg4[%c0_6, %c0_7] : memref<64x32xf32, #tpu.memory_space<vmem>>, vector<64x32xf32>
    %cst_8 = arith.constant dense<0.000000e+00> : vector<32x32xf32>
    %49 = tpu.matmul %47, %48, %cst_8 {dimension_numbers = #tpu.dot_dimension_numbers<[1], [0], [0], [1], [0, 0, 1, 1], [], []>} : vector<32x64xf32>, vector<64x32xf32>, vector<32x32xf32> -> vector<32x32xf32>
    %c0_9 = arith.constant 0 : index
    %c0_10 = arith.constant 0 : index
    %50 = vector.load %arg5[%c0_9, %c0_10] : memref<1x32xf32, #tpu.memory_space<vmem>>, vector<1x32xf32>
    %51 = vector.broadcast %50 : vector<1x32xf32> to vector<32x32xf32>
    %52 = arith.addf %49, %51 : vector<32x32xf32>
    %cst_11 = arith.constant 0.000000e+00 : f32
    %53 = vector.broadcast %cst_11 : f32 to vector<32x32xf32>
    %54 = arith.cmpf oge, %52, %53 : vector<32x32xf32>
    %cst_12 = arith.constant 1.000000e-01 : f32
    %55 = vector.broadcast %cst_12 : f32 to vector<32x32xf32>
    %56 = arith.mulf %55, %52 : vector<32x32xf32>
    %57 = arith.select %54, %52, %56 : vector<32x32xi1>, vector<32x32xf32>
    %58 = vector.extract_strided_slice %57 {offsets = [0, 0], sizes = [16, 32], strides = [1, 1]} : vector<32x32xf32> to vector<16x32xf32>
    %59 = vector.extract_strided_slice %57 {offsets = [16, 0], sizes = [16, 32], strides = [1, 1]} : vector<32x32xf32> to vector<16x32xf32>
    %60 = arith.maximumf %58, %59 : vector<16x32xf32>
    %61 = vector.extract_strided_slice %60 {offsets = [0, 0], sizes = [2, 32], strides = [1, 1]} : vector<16x32xf32> to vector<2x32xf32>
    %62 = vector.extract_strided_slice %60 {offsets = [2, 0], sizes = [2, 32], strides = [1, 1]} : vector<16x32xf32> to vector<2x32xf32>
    %63 = vector.extract_strided_slice %60 {offsets = [4, 0], sizes = [2, 32], strides = [1, 1]} : vector<16x32xf32> to vector<2x32xf32>
    %64 = vector.extract_strided_slice %60 {offsets = [6, 0], sizes = [2, 32], strides = [1, 1]} : vector<16x32xf32> to vector<2x32xf32>
    %65 = vector.extract_strided_slice %60 {offsets = [8, 0], sizes = [2, 32], strides = [1, 1]} : vector<16x32xf32> to vector<2x32xf32>
    %66 = vector.extract_strided_slice %60 {offsets = [10, 0], sizes = [2, 32], strides = [1, 1]} : vector<16x32xf32> to vector<2x32xf32>
    %67 = vector.extract_strided_slice %60 {offsets = [12, 0], sizes = [2, 32], strides = [1, 1]} : vector<16x32xf32> to vector<2x32xf32>
    %68 = vector.extract_strided_slice %60 {offsets = [14, 0], sizes = [2, 32], strides = [1, 1]} : vector<16x32xf32> to vector<2x32xf32>
    %69 = tpu.concatenate %61, %62, %63, %64, %65, %66, %67, %68 in 1 : vector<2x32xf32>, vector<2x32xf32>, vector<2x32xf32>, vector<2x32xf32>, vector<2x32xf32>, vector<2x32xf32>, vector<2x32xf32>, vector<2x32xf32> -> vector<2x256xf32>
    %c0_13 = arith.constant 0 : index
    %c0_14 = arith.constant 0 : index
    %70 = vector.load %arg6[%c0_13, %c0_14] : memref<256x256xf32, #tpu.memory_space<vmem>>, vector<256x256xf32>
    %cst_15 = arith.constant dense<0.000000e+00> : vector<2x256xf32>
    %71 = tpu.matmul %69, %70, %cst_15 {dimension_numbers = #tpu.dot_dimension_numbers<[1], [0], [0], [1], [0, 0, 1, 1], [], []>} : vector<2x256xf32>, vector<256x256xf32>, vector<2x256xf32> -> vector<2x256xf32>
    %c0_16 = arith.constant 0 : index
    %c0_17 = arith.constant 0 : index
    %72 = vector.load %arg7[%c0_16, %c0_17] : memref<1x256xf32, #tpu.memory_space<vmem>>, vector<1x256xf32>
    %73 = vector.broadcast %72 : vector<1x256xf32> to vector<2x256xf32>
    %74 = arith.addf %71, %73 : vector<2x256xf32>
    %cst_18 = arith.constant 0.000000e+00 : f32
    %75 = vector.broadcast %cst_18 : f32 to vector<2x256xf32>
    %76 = arith.cmpf oge, %74, %75 : vector<2x256xf32>
    %cst_19 = arith.constant 1.000000e-01 : f32
    %77 = vector.broadcast %cst_19 : f32 to vector<2x256xf32>
    %78 = arith.mulf %77, %74 : vector<2x256xf32>
    %79 = arith.select %76, %74, %78 : vector<2x256xi1>, vector<2x256xf32>
    %c0_20 = arith.constant 0 : index
    %c0_21 = arith.constant 0 : index
    %80 = vector.load %arg8[%c0_20, %c0_21] : memref<256x128xf32, #tpu.memory_space<vmem>>, vector<256x128xf32>
    %cst_22 = arith.constant dense<0.000000e+00> : vector<2x128xf32>
    %81 = tpu.matmul %79, %80, %cst_22 {dimension_numbers = #tpu.dot_dimension_numbers<[1], [0], [0], [1], [0, 0, 1, 1], [], []>} : vector<2x256xf32>, vector<256x128xf32>, vector<2x128xf32> -> vector<2x128xf32>
    %c0_23 = arith.constant 0 : index
    %c0_24 = arith.constant 0 : index
    %82 = vector.load %arg9[%c0_23, %c0_24] : memref<1x128xf32, #tpu.memory_space<vmem>>, vector<1x128xf32>
    %83 = vector.broadcast %82 : vector<1x128xf32> to vector<2x128xf32>
    %84 = arith.addf %81, %83 : vector<2x128xf32>
    %c0_25 = arith.constant 0 : index
    %c0_26 = arith.constant 0 : index
    %85 = vector.load %arg10[%c0_25, %c0_26] : memref<2x128xf32, #tpu.memory_space<vmem>>, vector<2x128xf32>
    tpu.vector_store %arg10[%c0_25, %c0_26], %84 {strides = array<i32>} : memref<2x128xf32, #tpu.memory_space<vmem>>, vector<2x128xf32>,
    return
  }
  func.func @transform_0(%arg0: i32) -> (i32, i32) {
    %c0_i32 = arith.constant 0 : i32
    %c0_i32_0 = arith.constant 0 : i32
    %c0_i32_1 = arith.constant 0 : i32
    return %c0_i32, %c0_i32_0 : i32, i32
  }
  func.func @transform_1(%arg0: i32) -> (i32, i32) {
    %c0_i32 = arith.constant 0 : i32
    %c0_i32_0 = arith.constant 0 : i32
    %c0_i32_1 = arith.constant 0 : i32
    return %c0_i32, %c0_i32_0 : i32, i32
  }
  func.func @transform_2(%arg0: i32) -> (i32, i32) {
    %c0_i32 = arith.constant 0 : i32
    %c0_i32_0 = arith.constant 0 : i32
    %c0_i32_1 = arith.constant 0 : i32
    return %c0_i32, %c0_i32_0 : i32, i32
  }
  func.func @transform_3(%arg0: i32) -> (i32, i32) {
    %c0_i32 = arith.constant 0 : i32
    %c0_i32_0 = arith.constant 0 : i32
    %c0_i32_1 = arith.constant 0 : i32
    return %c0_i32, %c0_i32_0 : i32, i32
  }
  func.func @transform_4(%arg0: i32) -> (i32, i32) {
    %c0_i32 = arith.constant 0 : i32
    %c0_i32_0 = arith.constant 0 : i32
    %c0_i32_1 = arith.constant 0 : i32
    return %c0_i32, %c0_i32_0 : i32, i32
  }
  func.func @transform_5(%arg0: i32) -> (i32, i32) {
    %c0_i32 = arith.constant 0 : i32
    %c0_i32_0 = arith.constant 0 : i32
    %c0_i32_1 = arith.constant 0 : i32
    return %c0_i32, %c0_i32_0 : i32, i32
  }
  func.func @transform_6(%arg0: i32) -> (i32, i32) {
    %c0_i32 = arith.constant 0 : i32
    %c0_i32_0 = arith.constant 0 : i32
    %c0_i32_1 = arith.constant 0 : i32
    return %c0_i32, %c0_i32_0 : i32, i32
  }
  func.func @transform_7(%arg0: i32) -> (i32, i32) {
    %c0_i32 = arith.constant 0 : i32
    %c0_i32_0 = arith.constant 0 : i32
    %c0_i32_1 = arith.constant 0 : i32
    return %c0_i32, %c0_i32_0 : i32, i32
  }
  func.func @transform_8(%arg0: i32) -> (i32, i32) {
    %c0_i32 = arith.constant 0 : i32
    %c0_i32_0 = arith.constant 0 : i32
    %c0_i32_1 = arith.constant 0 : i32
    return %c0_i32, %c0_i32_0 : i32, i32
  }
  func.func @transform_9(%arg0: i32) -> (i32, i32) {
    %c0_i32 = arith.constant 0 : i32
    %c0_i32_0 = arith.constant 0 : i32
    %c0_i32_1 = arith.constant 0 : i32
    return %c0_i32, %c0_i32_0 : i32, i32
  }
}

</mosaic_0001>

<llo_original>
// kernel: tpu_custom_call.1
$region0: #{tpu_custom_call.1}
  #allocation0 [shape = 'u32[]', space=smem, size = 0x4, offset = 0x4, fixed_abs, tag = 'smem constant byte address 0x4 - core index']
  #allocation1 [shape = 'u32[72,128]{1,0:T(1,128)}', space=vmem, size = 0x9000, scoped, tag = 'internal scratch']
  %s0 = inlined_call_operand.vmem [shape: f32[128,3], index: 0, kind: input, shape index: {}]
  %s1 = inlined_call_operand.vmem [shape: f32[3,16], index: 1, kind: input, shape index: {}]
  %s2 = inlined_call_operand.vmem [shape: f32[1,16], index: 2, kind: input, shape index: {}]
  %s3 = inlined_call_operand.vmem [shape: f32[64,32], index: 3, kind: input, shape index: {}]
  %s4 = inlined_call_operand.vmem [shape: f32[1,32], index: 4, kind: input, shape index: {}]
  %s5 = inlined_call_operand.hbm [shape: f32[256,256], index: 5, kind: input, shape index: {}]
  %s6 = inlined_call_operand.vmem [shape: f32[1,256], index: 6, kind: input, shape index: {}]
  %s7 = inlined_call_operand.hbm [shape: f32[256,128], index: 7, kind: input, shape index: {}]
  %s8 = inlined_call_operand.vmem [shape: f32[1,128], index: 8, kind: input, shape index: {}]
  %s9 = inlined_call_operand.hbm [shape: f32[2,128], index: 9, kind: output, shape index: {}]
  %s10 = sld [smem:[#allocation0]]
  $region54: #{tpu_custom_call.1} parent=0
    _
  %s12 = ssub.s32 1, %s10
  %s13 = scalar_select 0, %s12, %s10
  $region1: #{tpu_custom_call.1} parent=0
    #allocation2 [shape = 'u8[262144]{0}', space=vmem, size = 0x40000, scoped, tag = 'input window, operand 5, single buffered']
    #allocation3 [shape = 's32[1]{0}', space=sflag, size = 0x4, scoped, tag = 'scoped memory for tpu_custom_call.1']
    #allocation4 [shape = 's32[1]{0}', space=sflag, size = 0x4, scoped, tag = 'scoped memory for tpu_custom_call.1']
    #allocation5 [shape = 'u8[131072]{0}', space=vmem, size = 0x20000, scoped, tag = 'input window, operand 7, single buffered']
    #allocation6 [shape = 's32[1]{0}', space=sflag, size = 0x4, scoped, tag = 'scoped memory for tpu_custom_call.1']
    #allocation7 [shape = 'u8[1024]{0}', space=vmem, size = 0x400, scoped, tag = 'output window, operand 0, single buffered']
    %14 = vsyncpa [#allocation3], 0
    %15 = vsyncpa [#allocation6], 0
    %16 = vsyncpa [#allocation4], 0
    // Predicated region
    $region2: #{tpu_custom_call.1} parent=1 // pred_check
      _
    $region3: #{tpu_custom_call.1} parent=1 // pred_check_branch
      %18 = sbr.rel (0) target = $region5
    $region4: #{tpu_custom_call.1} parent=1 // pred_region
      _
    $region5: #{tpu_custom_call.1} parent=1 // pred_fallthru
      _
    // Predicated region
    $region6: #{tpu_custom_call.1} parent=1 // pred_check
      _
    $region7: #{tpu_custom_call.1} parent=1 // pred_check_branch
      %20 = sbr.rel (0) target = $region9
    $region8: #{tpu_custom_call.1} parent=1 // pred_region
      _
    $region9: #{tpu_custom_call.1} parent=1 // pred_fallthru
      _
    // Predicated region
    $region10: #{tpu_custom_call.1} parent=1 // pred_check
      _
    $region11: #{tpu_custom_call.1} parent=1 // pred_check_branch
      %22 = sbr.rel (0) target = $region13
    $region12: #{tpu_custom_call.1} parent=1 // pred_region
      _
    $region13: #{tpu_custom_call.1} parent=1 // pred_fallthru
      _
    // Predicated region
    $region14: #{tpu_custom_call.1} parent=1 // pred_check
      _
    $region15: #{tpu_custom_call.1} parent=1 // pred_check_branch
      %24 = sbr.rel (0) target = $region17
    $region16: #{tpu_custom_call.1} parent=1 // pred_region
      _
    $region17: #{tpu_custom_call.1} parent=1 // pred_fallthru
      _
    // Predicated region
    $region18: #{tpu_custom_call.1} parent=1 // pred_check
      _
    $region19: #{tpu_custom_call.1} parent=1 // pred_check_branch
      %26 = sbr.rel (0) target = $region21
    $region20: #{tpu_custom_call.1} parent=1 // pred_region
      _
    $region21: #{tpu_custom_call.1} parent=1 // pred_fallthru
      _
    // Predicated region
    $region22: #{tpu_custom_call.1} parent=1 // pred_check
      _
    $region23: #{tpu_custom_call.1} parent=1 // pred_check_branch
      %28 = sbr.rel (0) target = $region25
    $region24: #{tpu_custom_call.1} parent=1 // pred_region
      %30 = vsyncadd [#allocation3], 0
      %s31 = sshll.u32 %s5, 4
      %s32 = int_to_ptr.hbm [resolvable:$true] %s31
      %s33 = sshll.u32 [#allocation2], 4
      %s34 = int_to_ptr.vmem [resolvable:$true] %s33
      %39 = dma.hbm_to_vmem [thread:$0]  %s32, 8192, %s34, [#allocation3], 256, 256, 16
    $region25: #{tpu_custom_call.1} parent=1 // pred_fallthru
      _
    // Predicated region
    $region26: #{tpu_custom_call.1} parent=1 // pred_check
      _
    $region27: #{tpu_custom_call.1} parent=1 // pred_check_branch
      %41 = sbr.rel (0) target = $region29
    $region28: #{tpu_custom_call.1} parent=1 // pred_region
      _
    $region29: #{tpu_custom_call.1} parent=1 // pred_fallthru
      _
    // Predicated region
    $region30: #{tpu_custom_call.1} parent=1 // pred_check
      _
    $region31: #{tpu_custom_call.1} parent=1 // pred_check_branch
      %43 = sbr.rel (0) target = $region33
    $region32: #{tpu_custom_call.1} parent=1 // pred_region
      %45 = vsyncadd [#allocation6], 0
      %s46 = sshll.u32 %s7, 4
      %s47 = int_to_ptr.hbm [resolvable:$true] %s46
      %s48 = sshll.u32 [#allocation5], 4
      %s49 = int_to_ptr.vmem [resolvable:$true] %s48
      %54 = dma.hbm_to_vmem [thread:$0]  %s47, 4096, %s49, [#allocation6], 128, 128, 8
    $region33: #{tpu_custom_call.1} parent=1 // pred_fallthru
      _
    // Predicated region
    $region34: #{tpu_custom_call.1} parent=1 // pred_check
      _
    $region35: #{tpu_custom_call.1} parent=1 // pred_check_branch
      %56 = sbr.rel (0) target = $region37
    $region36: #{tpu_custom_call.1} parent=1 // pred_region
      _
    $region37: #{tpu_custom_call.1} parent=1 // pred_fallthru
      _
    // Predicated region
    $region38: #{tpu_custom_call.1} parent=1 // pred_check
      _
    $region39: #{tpu_custom_call.1} parent=1 // pred_check_branch
      %58 = sbr.rel (0) target = $region41
    $region40: #{tpu_custom_call.1} parent=1 // pred_region
      %60 = dma.done [#allocation3], 8192
    $region41: #{tpu_custom_call.1} parent=1 // pred_fallthru
      _
    // Predicated region
    $region42: #{tpu_custom_call.1} parent=1 // pred_check
      _
    $region43: #{tpu_custom_call.1} parent=1 // pred_check_branch
      %62 = sbr.rel (0) target = $region45
    $region44: #{tpu_custom_call.1} parent=1 // pred_region
      %64 = dma.done [#allocation6], 4096
    $region45: #{tpu_custom_call.1} parent=1 // pred_fallthru
      _
    %v65 = vld [vmem:[%s0] sm:$0xff]
    %v66 = vld [vmem:[%s0 + $0x8] sm:$0xff]
    %v67 = vld [vmem:[%s0 + $0x10] sm:$0xff]
    %v68 = vld [vmem:[%s0 + $0x18] sm:$0xff]
    %v69 = vld [vmem:[%s0 + $0x20] sm:$0xff]
    %v70 = vld [vmem:[%s0 + $0x28] sm:$0xff]
    %v71 = vld [vmem:[%s0 + $0x30] sm:$0xff]
    %v72 = vld [vmem:[%s0 + $0x38] sm:$0xff]
    %v73 = vld [vmem:[%s0 + $0x40] sm:$0xff]
    %v74 = vld [vmem:[%s0 + $0x48] sm:$0xff]
    %v75 = vld [vmem:[%s0 + $0x50] sm:$0xff]
    %v76 = vld [vmem:[%s0 + $0x58] sm:$0xff]
    %v77 = vld [vmem:[%s0 + $0x60] sm:$0xff]
    %v78 = vld [vmem:[%s0 + $0x68] sm:$0xff]
    %v79 = vld [vmem:[%s0 + $0x70] sm:$0xff]
    %v80 = vld [vmem:[%s0 + $0x78] sm:$0xff]
    %v81 = vld [vmem:[%s1] sm:$0x7]
    %83 = vset.pattern.permute.xlu0 0
    %84 = vperm.xlu0 %83, %v65
    %v85 = vpop.permute.xlu0 %84
    %88 = vset.pattern.permute.xlu0 0
    %89 = vperm.xlu0 %88, %v66
    %v90 = vpop.permute.xlu0 %89
    %93 = vset.pattern.permute.xlu0 0
    %94 = vperm.xlu0 %93, %v67
    %v95 = vpop.permute.xlu0 %94
    %98 = vset.pattern.permute.xlu0 0
    %99 = vperm.xlu0 %98, %v68
    %v100 = vpop.permute.xlu0 %99
    %103 = vset.pattern.permute.xlu0 0
    %104 = vperm.xlu0 %103, %v69
    %v105 = vpop.permute.xlu0 %104
    %108 = vset.pattern.permute.xlu0 0
    %109 = vperm.xlu0 %108, %v70
    %v110 = vpop.permute.xlu0 %109
    %113 = vset.pattern.permute.xlu0 0
    %114 = vperm.xlu0 %113, %v71
    %v115 = vpop.permute.xlu0 %114
    %118 = vset.pattern.permute.xlu0 0
    %119 = vperm.xlu0 %118, %v72
    %v120 = vpop.permute.xlu0 %119
    %123 = vset.pattern.permute.xlu0 0
    %124 = vperm.xlu0 %123, %v73
    %v125 = vpop.permute.xlu0 %124
    %128 = vset.pattern.permute.xlu0 0
    %129 = vperm.xlu0 %128, %v74
    %v130 = vpop.permute.xlu0 %129
    %133 = vset.pattern.permute.xlu0 0
    %134 = vperm.xlu0 %133, %v75
    %v135 = vpop.permute.xlu0 %134
    %138 = vset.pattern.permute.xlu0 0
    %139 = vperm.xlu0 %138, %v76
    %v140 = vpop.permute.xlu0 %139
    %143 = vset.pattern.permute.xlu0 0
    %144 = vperm.xlu0 %143, %v77
    %v145 = vpop.permute.xlu0 %144
    %148 = vset.pattern.permute.xlu0 0
    %149 = vperm.xlu0 %148, %v78
    %v150 = vpop.permute.xlu0 %149
    %153 = vset.pattern.permute.xlu0 0
    %154 = vperm.xlu0 %153, %v79
    %v155 = vpop.permute.xlu0 %154
    %158 = vset.pattern.permute.xlu0 0
    %159 = vperm.xlu0 %158, %v80
    %v160 = vpop.permute.xlu0 %159
    %v162 = vperm.slane %v81, 0
    %v163 = vmul.f32 %v85, %v162
    %v164 = vmul.f32 %v90, %v162
    %v165 = vmul.f32 %v95, %v162
    %v166 = vmul.f32 %v100, %v162
    %v167 = vmul.f32 %v105, %v162
    %v168 = vmul.f32 %v110, %v162
    %v169 = vmul.f32 %v115, %v162
    %v170 = vmul.f32 %v120, %v162
    %v171 = vmul.f32 %v125, %v162
    %v172 = vmul.f32 %v130, %v162
    %v173 = vmul.f32 %v135, %v162
    %v174 = vmul.f32 %v140, %v162
    %v175 = vmul.f32 %v145, %v162
    %v176 = vmul.f32 %v150, %v162
    %v177 = vmul.f32 %v155, %v162
    %v178 = vmul.f32 %v160, %v162
    %179 = vset.pattern.permute.xlu0 1
    %180 = vperm.xlu0 %179, %v65
    %v181 = vpop.permute.xlu0 %180
    %183 = vset.pattern.permute.xlu0 1
    %184 = vperm.xlu0 %183, %v66
    %v185 = vpop.permute.xlu0 %184
    %187 = vset.pattern.permute.xlu0 1
    %188 = vperm.xlu0 %187, %v67
    %v189 = vpop.permute.xlu0 %188
    %191 = vset.pattern.permute.xlu0 1
    %192 = vperm.xlu0 %191, %v68
    %v193 = vpop.permute.xlu0 %192
    %195 = vset.pattern.permute.xlu0 1
    %196 = vperm.xlu0 %195, %v69
    %v197 = vpop.permute.xlu0 %196
    %199 = vset.pattern.permute.xlu0 1
    %200 = vperm.xlu0 %199, %v70
    %v201 = vpop.permute.xlu0 %200
    %203 = vset.pattern.permute.xlu0 1
    %204 = vperm.xlu0 %203, %v71
    %v205 = vpop.permute.xlu0 %204
    %207 = vset.pattern.permute.xlu0 1
    %208 = vperm.xlu0 %207, %v72
    %v209 = vpop.permute.xlu0 %208
    %211 = vset.pattern.permute.xlu0 1
    %212 = vperm.xlu0 %211, %v73
    %v213 = vpop.permute.xlu0 %212
    %215 = vset.pattern.permute.xlu0 1
    %216 = vperm.xlu0 %215, %v74
    %v217 = vpop.permute.xlu0 %216
    %219 = vset.pattern.permute.xlu0 1
    %220 = vperm.xlu0 %219, %v75
    %v221 = vpop.permute.xlu0 %220
    %223 = vset.pattern.permute.xlu0 1
    %224 = vperm.xlu0 %223, %v76
    %v225 = vpop.permute.xlu0 %224
    %227 = vset.pattern.permute.xlu0 1
    %228 = vperm.xlu0 %227, %v77
    %v229 = vpop.permute.xlu0 %228
    %231 = vset.pattern.permute.xlu0 1
    %232 = vperm.xlu0 %231, %v78
    %v233 = vpop.permute.xlu0 %232
    %235 = vset.pattern.permute.xlu0 1
    %236 = vperm.xlu0 %235, %v79
    %v237 = vpop.permute.xlu0 %236
    %239 = vset.pattern.permute.xlu0 1
    %240 = vperm.xlu0 %239, %v80
    %v241 = vpop.permute.xlu0 %240
    %v243 = vperm.slane %v81, 1
    %v244 = vmul.f32 %v181, %v243
    %v245 = vmul.f32 %v185, %v243
    %v246 = vmul.f32 %v189, %v243
    %v247 = vmul.f32 %v193, %v243
    %v248 = vmul.f32 %v197, %v243
    %v249 = vmul.f32 %v201, %v243
    %v250 = vmul.f32 %v205, %v243
    %v251 = vmul.f32 %v209, %v243
    %v252 = vmul.f32 %v213, %v243
    %v253 = vmul.f32 %v217, %v243
    %v254 = vmul.f32 %v221, %v243
    %v255 = vmul.f32 %v225, %v243
    %v256 = vmul.f32 %v229, %v243
    %v257 = vmul.f32 %v233, %v243
    %v258 = vmul.f32 %v237, %v243
    %v259 = vmul.f32 %v241, %v243
    %v260 = vadd.f32 %v163, %v244
    %v261 = vadd.f32 %v164, %v245
    %v262 = vadd.f32 %v165, %v246
    %v263 = vadd.f32 %v166, %v247
    %v264 = vadd.f32 %v167, %v248
    %v265 = vadd.f32 %v168, %v249
    %v266 = vadd.f32 %v169, %v250
    %v267 = vadd.f32 %v170, %v251
    %v268 = vadd.f32 %v171, %v252
    %v269 = vadd.f32 %v172, %v253
    %v270 = vadd.f32 %v173, %v254
    %v271 = vadd.f32 %v174, %v255
    %v272 = vadd.f32 %v175, %v256
    %v273 = vadd.f32 %v176, %v257
    %v274 = vadd.f32 %v177, %v258
    %v275 = vadd.f32 %v178, %v259
    %276 = vset.pattern.permute.xlu0 2
    %277 = vperm.xlu0 %276, %v65
    %v278 = vpop.permute.xlu0 %277
    %280 = vset.pattern.permute.xlu0 2
    %281 = vperm.xlu0 %280, %v66
    %v282 = vpop.permute.xlu0 %281
    %284 = vset.pattern.permute.xlu0 2
    %285 = vperm.xlu0 %284, %v67
    %v286 = vpop.permute.xlu0 %285
    %288 = vset.pattern.permute.xlu0 2
    %289 = vperm.xlu0 %288, %v68
    %v290 = vpop.permute.xlu0 %289
    %292 = vset.pattern.permute.xlu0 2
    %293 = vperm.xlu0 %292, %v69
    %v294 = vpop.permute.xlu0 %293
    %296 = vset.pattern.permute.xlu0 2
    %297 = vperm.xlu0 %296, %v70
    %v298 = vpop.permute.xlu0 %297
    %300 = vset.pattern.permute.xlu0 2
    %301 = vperm.xlu0 %300, %v71
    %v302 = vpop.permute.xlu0 %301
    %304 = vset.pattern.permute.xlu0 2
    %305 = vperm.xlu0 %304, %v72
    %v306 = vpop.permute.xlu0 %305
    %308 = vset.pattern.permute.xlu0 2
    %309 = vperm.xlu0 %308, %v73
    %v310 = vpop.permute.xlu0 %309
    %312 = vset.pattern.permute.xlu0 2
    %313 = vperm.xlu0 %312, %v74
    %v314 = vpop.permute.xlu0 %313
    %316 = vset.pattern.permute.xlu0 2
    %317 = vperm.xlu0 %316, %v75
    %v318 = vpop.permute.xlu0 %317
    %320 = vset.pattern.permute.xlu0 2
    %321 = vperm.xlu0 %320, %v76
    %v322 = vpop.permute.xlu0 %321
    %324 = vset.pattern.permute.xlu0 2
    %325 = vperm.xlu0 %324, %v77
    %v326 = vpop.permute.xlu0 %325
    %328 = vset.pattern.permute.xlu0 2
    %329 = vperm.xlu0 %328, %v78
    %v330 = vpop.permute.xlu0 %329
    %332 = vset.pattern.permute.xlu0 2
    %333 = vperm.xlu0 %332, %v79
    %v334 = vpop.permute.xlu0 %333
    %336 = vset.pattern.permute.xlu0 2
    %337 = vperm.xlu0 %336, %v80
    %v338 = vpop.permute.xlu0 %337
    %v340 = vperm.slane %v81, 2
    %v341 = vmul.f32 %v278, %v340
    %v342 = vmul.f32 %v282, %v340
    %v343 = vmul.f32 %v286, %v340
    %v344 = vmul.f32 %v290, %v340
    %v345 = vmul.f32 %v294, %v340
    %v346 = vmul.f32 %v298, %v340
    %v347 = vmul.f32 %v302, %v340
    %v348 = vmul.f32 %v306, %v340
    %v349 = vmul.f32 %v310, %v340
    %v350 = vmul.f32 %v314, %v340
    %v351 = vmul.f32 %v318, %v340
    %v352 = vmul.f32 %v322, %v340
    %v353 = vmul.f32 %v326, %v340
    %v354 = vmul.f32 %v330, %v340
    %v355 = vmul.f32 %v334, %v340
    %v356 = vmul.f32 %v338, %v340
    %v357 = vadd.f32 %v260, %v341
    %v358 = vadd.f32 %v261, %v342
    %v359 = vadd.f32 %v262, %v343
    %v360 = vadd.f32 %v263, %v344
    %v361 = vadd.f32 %v264, %v345
    %v362 = vadd.f32 %v265, %v346
    %v363 = vadd.f32 %v266, %v347
    %v364 = vadd.f32 %v267, %v348
    %v365 = vadd.f32 %v268, %v349
    %v366 = vadd.f32 %v269, %v350
    %v367 = vadd.f32 %v270, %v351
    %v368 = vadd.f32 %v271, %v352
    %v369 = vadd.f32 %v272, %v353
    %v370 = vadd.f32 %v273, %v354
    %v371 = vadd.f32 %v274, %v355
    %v372 = vadd.f32 %v275, %v356
    %v373 = vld [vmem:[%s2] sm:$0x1]
    %v375 = vperm.slane %v373, 0
    %v377 = vadd.f32 %v357, %v375
    %v378 = vadd.f32 %v358, %v375
    %v379 = vadd.f32 %v359, %v375
    %v380 = vadd.f32 %v360, %v375
    %v381 = vadd.f32 %v361, %v375
    %v382 = vadd.f32 %v362, %v375
    %v383 = vadd.f32 %v363, %v375
    %v384 = vadd.f32 %v364, %v375
    %v385 = vadd.f32 %v365, %v375
    %v386 = vadd.f32 %v366, %v375
    %v387 = vadd.f32 %v367, %v375
    %v388 = vadd.f32 %v368, %v375
    %v389 = vadd.f32 %v369, %v375
    %v390 = vadd.f32 %v370, %v375
    %v391 = vadd.f32 %v371, %v375
    %v392 = vadd.f32 %v372, %v375
    %vm393 = vcmp.ge.f32.partialorder %v377, 0.0
    %vm394 = vcmp.ge.f32.partialorder %v378, 0.0
    %vm395 = vcmp.ge.f32.partialorder %v379, 0.0
    %vm396 = vcmp.ge.f32.partialorder %v380, 0.0
    %vm397 = vcmp.ge.f32.partialorder %v381, 0.0
    %vm398 = vcmp.ge.f32.partialorder %v382, 0.0
    %vm399 = vcmp.ge.f32.partialorder %v383, 0.0
    %vm400 = vcmp.ge.f32.partialorder %v384, 0.0
    %vm401 = vcmp.ge.f32.partialorder %v385, 0.0
    %vm402 = vcmp.ge.f32.partialorder %v386, 0.0
    %vm403 = vcmp.ge.f32.partialorder %v387, 0.0
    %vm404 = vcmp.ge.f32.partialorder %v388, 0.0
    %vm405 = vcmp.ge.f32.partialorder %v389, 0.0
    %vm406 = vcmp.ge.f32.partialorder %v390, 0.0
    %vm407 = vcmp.ge.f32.partialorder %v391, 0.0
    %vm408 = vcmp.ge.f32.partialorder %v392, 0.0
    %v409 = vmul.f32 %v377, 0.1
    %v410 = vmul.f32 %v378, 0.1
    %v411 = vmul.f32 %v379, 0.1
    %v412 = vmul.f32 %v380, 0.1
    %v413 = vmul.f32 %v381, 0.1
    %v414 = vmul.f32 %v382, 0.1
    %v415 = vmul.f32 %v383, 0.1
    %v416 = vmul.f32 %v384, 0.1
    %v417 = vmul.f32 %v385, 0.1
    %v418 = vmul.f32 %v386, 0.1
    %v419 = vmul.f32 %v387, 0.1
    %v420 = vmul.f32 %v388, 0.1
    %v421 = vmul.f32 %v389, 0.1
    %v422 = vmul.f32 %v390, 0.1
    %v423 = vmul.f32 %v391, 0.1
    %v424 = vmul.f32 %v392, 0.1
    %v425 = vsel %vm393, %v377, %v409
    %v426 = vsel %vm394, %v378, %v410
    %v427 = vsel %vm395, %v379, %v411
    %v428 = vsel %vm396, %v380, %v412
    %v429 = vsel %vm397, %v381, %v413
    %v430 = vsel %vm398, %v382, %v414
    %v431 = vsel %vm399, %v383, %v415
    %v432 = vsel %vm400, %v384, %v416
    %v433 = vsel %vm401, %v385, %v417
    %v434 = vsel %vm402, %v386, %v418
    %v435 = vsel %vm403, %v387, %v419
    %v436 = vsel %vm404, %v388, %v420
    %v437 = vsel %vm405, %v389, %v421
    %v438 = vsel %vm406, %v390, %v422
    %v439 = vsel %vm407, %v391, %v423
    %v440 = vsel %vm408, %v392, %v424
    %v441 = vmax.f32 %v425, %v427
    %v442 = vmax.f32 %v426, %v428
    %v443 = vmax.f32 %v429, %v431
    %v444 = vmax.f32 %v430, %v432
    %v445 = vmax.f32 %v433, %v435
    %v446 = vmax.f32 %v434, %v436
    %v447 = vmax.f32 %v437, %v439
    %v448 = vmax.f32 %v438, %v440
    %vm451 = vcmask 1045504
    %v452 = vrot.slane %v441, 2
    %v453 = vrot.slane %v442, 2
    %v454 = vsel %vm451, %v452, %v453
    %v457 = vsel %vm451, %v453, %v452
    %v460 = vrot.slane %v443, 2
    %v461 = vrot.slane %v444, 2
    %v462 = vsel %vm451, %v460, %v461
    %v465 = vsel %vm451, %v461, %v460
    %466 = vrot.lane.b32.xlu0 %v443, 16
    %v467 = vpop.permute.xlu0 %466
    %468 = vrot.lane.b32.xlu0 %v444, 16
    %v469 = vpop.permute.xlu0 %468
    %474 = vrot.lane.b32.xlu0 %v445, 32
    %v475 = vpop.permute.xlu0 %474
    %476 = vrot.lane.b32.xlu0 %v446, 32
    %v477 = vpop.permute.xlu0 %476
    %482 = vrot.lane.b32.xlu0 %v447, 48
    %v483 = vpop.permute.xlu0 %482
    %484 = vrot.lane.b32.xlu0 %v448, 48
    %v485 = vpop.permute.xlu0 %484
    %vm488 = vcmask 130048
    %v489 = vsel %vm488, %v441, %v467
    %v490 = vsel %vm488, %v442, %v469
    %vm491 = vcmask 261120
    %v492 = vsel %vm491, %v489, %v475
    %v493 = vsel %vm491, %v490, %v477
    %vm494 = vcmask 392192
    %v495 = vsel %vm494, %v492, %v483
    %v496 = vsel %vm494, %v493, %v485
    %497 = vrot.lane.b32.xlu0 %v447, 16
    %v498 = vpop.permute.xlu0 %497
    %499 = vrot.lane.b32.xlu0 %v448, 16
    %v500 = vpop.permute.xlu0 %499
    %504 = vrot.lane.b32.xlu0 %v454, 32
    %v505 = vpop.permute.xlu0 %504
    %506 = vrot.lane.b32.xlu0 %v457, 32
    %v507 = vpop.permute.xlu0 %506
    %511 = vrot.lane.b32.xlu0 %v462, 48
    %v512 = vpop.permute.xlu0 %511
    %513 = vrot.lane.b32.xlu0 %v465, 48
    %v514 = vpop.permute.xlu0 %513
    %v517 = vsel %vm488, %v445, %v498
    %v518 = vsel %vm488, %v446, %v500
    %v519 = vsel %vm491, %v517, %v505
    %v520 = vsel %vm491, %v518, %v507
    %v521 = vsel %vm494, %v519, %v512
    %v522 = vsel %vm494, %v520, %v514
    %v523 = vld [vmem:[%s3] sm:$0xff]
    %v524 = vld [vmem:[%s3 + $0x8] sm:$0xff]
    %v525 = vld [vmem:[%s3 + $0x10] sm:$0xff]
    %v526 = vld [vmem:[%s3 + $0x18] sm:$0xff]
    %v527 = vld [vmem:[%s3 + $0x20] sm:$0xff]
    %v528 = vld [vmem:[%s3 + $0x28] sm:$0xff]
    %v529 = vld [vmem:[%s3 + $0x30] sm:$0xff]
    %v530 = vld [vmem:[%s3 + $0x38] sm:$0xff]
    %v531 = vld [vmem:[%s4] sm:$0x1]
    %v533 = vperm.slane %v531, 0
    %vm535 = vcmask 523264
    %v537 = vsel %vm535, %v495, 0
    %v540 = vsel %vm535, %v496, 0
    %v543 = vsel %vm535, %v521, 0
    %v546 = vsel %vm535, %v522, 0
    %548 = vmatpush.msra.mxu0 0.0
    %549 = vmatpush.msra.mxu0 0.0
    %550 = vmatpush.msra.mxu0 0.0
    %551 = vmatpush.msra.mxu0 0.0
    %552 = vmatpush.msra.mxu0 0.0
    %553 = vmatpush.msra.mxu0 0.0
    %554 = vmatpush.msra.mxu0 0.0
    %555 = vmatpush.msra.mxu0 0.0
    %556 = vmatpush.msra.mxu0 %v530
    %557 = vmatpush.msra.mxu0 %v529
    %558 = vmatpush.msra.mxu0 %v528
    %559 = vmatpush.msra.mxu0 %v527
    %560 = vmatpush.msra.mxu0 %v526
    %561 = vmatpush.msra.mxu0 %v525
    %562 = vmatpush.msra.mxu0 %v524
    %563 = vmatpush.msra.mxu0 %v523
    %564 = vmatmul.f32.gmra.mxu0 %v537
    %v565 = vpop.f32.mrf.mxu0
    %v566 = vadd.f32 %v533, %v565
    %567 = vmatmul.f32.gmra.mxu0 %v540
    %v568 = vpop.f32.mrf.mxu0
    %v569 = vadd.f32 %v533, %v568
    %570 = vmatmul.f32.gmra.mxu0 %v543
    %v571 = vpop.f32.mrf.mxu0
    %v572 = vadd.f32 %v533, %v571
    %573 = vmatmul.f32.gmra.mxu0 %v546
    %v574 = vpop.f32.mrf.mxu0
    %v575 = vadd.f32 %v533, %v574
    %576 = vdwg.mxu0
    %vm577 = vcmp.ge.f32.partialorder %v566, 0.0
    %vm578 = vcmp.ge.f32.partialorder %v569, 0.0
    %vm579 = vcmp.ge.f32.partialorder %v572, 0.0
    %vm580 = vcmp.ge.f32.partialorder %v575, 0.0
    %v581 = vmul.f32 %v566, 0.1
    %v582 = vmul.f32 %v569, 0.1
    %v583 = vmul.f32 %v572, 0.1
    %v584 = vmul.f32 %v575, 0.1
    %v585 = vsel %vm577, %v566, %v581
    %v586 = vsel %vm578, %v569, %v582
    %v587 = vsel %vm579, %v572, %v583
    %v588 = vsel %vm580, %v575, %v584
    %v589 = vmax.f32 %v585, %v587
    %v590 = vmax.f32 %v586, %v588
    %v592 = vrot.slane %v589, 2
    %593 = vrot.lane.b32.xlu0 %v592, 32
    %v594 = vpop.permute.xlu0 %593
    %v596 = vrot.slane %v589, 4
    %597 = vrot.lane.b32.xlu0 %v596, 64
    %v598 = vpop.permute.xlu0 %597
    %v600 = vrot.slane %v589, 6
    %601 = vrot.lane.b32.xlu0 %v600, 96
    %v602 = vpop.permute.xlu0 %601
    %v605 = vrot.slane %v590, 2
    %606 = vrot.lane.b32.xlu0 %v605, 32
    %v607 = vpop.permute.xlu0 %606
    %v609 = vrot.slane %v590, 4
    %610 = vrot.lane.b32.xlu0 %v609, 64
    %v611 = vpop.permute.xlu0 %610
    %v613 = vrot.slane %v590, 6
    %614 = vrot.lane.b32.xlu0 %v613, 96
    %v615 = vpop.permute.xlu0 %614
    %v617 = vsel %vm491, %v589, %v594
    %v618 = vsel %vm535, %v617, %v598
    %vm619 = vcmask 785408
    %v620 = vsel %vm619, %v618, %v602
    %v621 = vsel %vm491, %v590, %v607
    %v622 = vsel %vm535, %v621, %v611
    %v623 = vsel %vm619, %v622, %v615
    %v624 = vld [vmem:[#allocation2] sm:$0xff]
    %v625 = vld [vmem:[#allocation2 + $0x8] sm:$0xff]
    %v626 = vld [vmem:[#allocation2 + $0x10] sm:$0xff]
    %v627 = vld [vmem:[#allocation2 + $0x18] sm:$0xff]
    %v628 = vld [vmem:[#allocation2 + $0x20] sm:$0xff]
    %v629 = vld [vmem:[#allocation2 + $0x28] sm:$0xff]
    %v630 = vld [vmem:[#allocation2 + $0x30] sm:$0xff]
    %v631 = vld [vmem:[#allocation2 + $0x38] sm:$0xff]
    %v632 = vld [vmem:[#allocation2 + $0x40] sm:$0xff]
    %v633 = vld [vmem:[#allocation2 + $0x48] sm:$0xff]
    %v634 = vld [vmem:[#allocation2 + $0x50] sm:$0xff]
    %v635 = vld [vmem:[#allocation2 + $0x58] sm:$0xff]
    %v636 = vld [vmem:[#allocation2 + $0x60] sm:$0xff]
    %v637 = vld [vmem:[#allocation2 + $0x68] sm:$0xff]
    %v638 = vld [vmem:[#allocation2 + $0x70] sm:$0xff]
    %v639 = vld [vmem:[#allocation2 + $0x78] sm:$0xff]
    %v640 = vld [vmem:[#allocation2 + $0x80] sm:$0xff]
    %v641 = vld [vmem:[#allocation2 + $0x88] sm:$0xff]
    %v642 = vld [vmem:[#allocation2 + $0x90] sm:$0xff]
    %v643 = vld [vmem:[#allocation2 + $0x98] sm:$0xff]
    %v644 = vld [vmem:[#allocation2 + $0xa0] sm:$0xff]
    %v645 = vld [vmem:[#allocation2 + $0xa8] sm:$0xff]
    %v646 = vld [vmem:[#allocation2 + $0xb0] sm:$0xff]
    %v647 = vld [vmem:[#allocation2 + $0xb8] sm:$0xff]
    %v648 = vld [vmem:[#allocation2 + $0xc0] sm:$0xff]
    %v649 = vld [vmem:[#allocation2 + $0xc8] sm:$0xff]
    %v650 = vld [vmem:[#allocation2 + $0xd0] sm:$0xff]
    %v651 = vld [vmem:[#allocation2 + $0xd8] sm:$0xff]
    %v652 = vld [vmem:[#allocation2 + $0xe0] sm:$0xff]
    %v653 = vld [vmem:[#allocation2 + $0xe8] sm:$0xff]
    %v654 = vld [vmem:[#allocation2 + $0xf0] sm:$0xff]
    %v655 = vld [vmem:[#allocation2 + $0xf8] sm:$0xff]
    %v656 = vld [vmem:[#allocation2 + $0x100] sm:$0xff]
    %v657 = vld [vmem:[#allocation2 + $0x108] sm:$0xff]
    %v658 = vld [vmem:[#allocation2 + $0x110] sm:$0xff]
    %v659 = vld [vmem:[#allocation2 + $0x118] sm:$0xff]
    %v660 = vld [vmem:[#allocation2 + $0x120] sm:$0xff]
    %v661 = vld [vmem:[#allocation2 + $0x128] sm:$0xff]
    %v662 = vld [vmem:[#allocation2 + $0x130] sm:$0xff]
    %v663 = vld [vmem:[#allocation2 + $0x138] sm:$0xff]
    %v664 = vld [vmem:[#allocation2 + $0x140] sm:$0xff]
    %v665 = vld [vmem:[#allocation2 + $0x148] sm:$0xff]
    %v666 = vld [vmem:[#allocation2 + $0x150] sm:$0xff]
    %v667 = vld [vmem:[#allocation2 + $0x158] sm:$0xff]
    %v668 = vld [vmem:[#allocation2 + $0x160] sm:$0xff]
    %v669 = vld [vmem:[#allocation2 + $0x168] sm:$0xff]
    %v670 = vld [vmem:[#allocation2 + $0x170] sm:$0xff]
    %v671 = vld [vmem:[#allocation2 + $0x178] sm:$0xff]
    %v672 = vld [vmem:[#allocation2 + $0x180] sm:$0xff]
    %v673 = vld [vmem:[#allocation2 + $0x188] sm:$0xff]
    %v674 = vld [vmem:[#allocation2 + $0x190] sm:$0xff]
    %v675 = vld [vmem:[#allocation2 + $0x198] sm:$0xff]
    %v676 = vld [vmem:[#allocation2 + $0x1a0] sm:$0xff]
    %v677 = vld [vmem:[#allocation2 + $0x1a8] sm:$0xff]
    %v678 = vld [vmem:[#allocation2 + $0x1b0] sm:$0xff]
    %v679 = vld [vmem:[#allocation2 + $0x1b8] sm:$0xff]
    %v680 = vld [vmem:[#allocation2 + $0x1c0] sm:$0xff]
    %v681 = vld [vmem:[#allocation2 + $0x1c8] sm:$0xff]
    %v682 = vld [vmem:[#allocation2 + $0x1d0] sm:$0xff]
    %v683 = vld [vmem:[#allocation2 + $0x1d8] sm:$0xff]
    %v684 = vld [vmem:[#allocation2 + $0x1e0] sm:$0xff]
    %v685 = vld [vmem:[#allocation2 + $0x1e8] sm:$0xff]
    %v686 = vld [vmem:[#allocation2 + $0x1f0] sm:$0xff]
    %v687 = vld [vmem:[#allocation2 + $0x1f8] sm:$0xff]
    %v688 = vld [vmem:[%s6] sm:$0x3]
    %v690 = vperm.slane %v688, 0
    %v691 = vperm.slane %v688, 1
    %694 = vmatpush.msra.mxu0 %v654
    %695 = vmatpush.msra.mxu0 %v652
    %696 = vmatpush.msra.mxu0 %v650
    %697 = vmatpush.msra.mxu0 %v648
    %698 = vmatpush.msra.mxu0 %v646
    %699 = vmatpush.msra.mxu0 %v644
    %700 = vmatpush.msra.mxu0 %v642
    %701 = vmatpush.msra.mxu0 %v640
    %702 = vmatpush.msra.mxu0 %v638
    %703 = vmatpush.msra.mxu0 %v636
    %704 = vmatpush.msra.mxu0 %v634
    %705 = vmatpush.msra.mxu0 %v632
    %706 = vmatpush.msra.mxu0 %v630
    %707 = vmatpush.msra.mxu0 %v628
    %708 = vmatpush.msra.mxu0 %v626
    %709 = vmatpush.msra.mxu0 %v624
    %710 = vmatmul.f32.gmra.mxu0 %v620
    %v711 = vpop.f32.mrf.mxu0
    %v712 = vadd.f32 %v690, %v711
    %713 = vdwg.mxu0
    %714 = vmatpush.msra.mxu0 %v686
    %715 = vmatpush.msra.mxu0 %v684
    %716 = vmatpush.msra.mxu0 %v682
    %717 = vmatpush.msra.mxu0 %v680
    %718 = vmatpush.msra.mxu0 %v678
    %719 = vmatpush.msra.mxu0 %v676
    %720 = vmatpush.msra.mxu0 %v674
    %721 = vmatpush.msra.mxu0 %v672
    %722 = vmatpush.msra.mxu0 %v670
    %723 = vmatpush.msra.mxu0 %v668
    %724 = vmatpush.msra.mxu0 %v666
    %725 = vmatpush.msra.mxu0 %v664
    %726 = vmatpush.msra.mxu0 %v662
    %727 = vmatpush.msra.mxu0 %v660
    %728 = vmatpush.msra.mxu0 %v658
    %729 = vmatpush.msra.mxu0 %v656
    %730 = vmatmul.f32.gmra.mxu0 %v623
    %v731 = vpop.f32.mrf.mxu0
    %v732 = vadd.f32 %v712, %v731
    %733 = vdwg.mxu0
    %734 = vmatpush.msra.mxu0 %v655
    %735 = vmatpush.msra.mxu0 %v653
    %736 = vmatpush.msra.mxu0 %v651
    %737 = vmatpush.msra.mxu0 %v649
    %738 = vmatpush.msra.mxu0 %v647
    %739 = vmatpush.msra.mxu0 %v645
    %740 = vmatpush.msra.mxu0 %v643
    %741 = vmatpush.msra.mxu0 %v641
    %742 = vmatpush.msra.mxu0 %v639
    %743 = vmatpush.msra.mxu0 %v637
    %744 = vmatpush.msra.mxu0 %v635
    %745 = vmatpush.msra.mxu0 %v633
    %746 = vmatpush.msra.mxu0 %v631
    %747 = vmatpush.msra.mxu0 %v629
    %748 = vmatpush.msra.mxu0 %v627
    %749 = vmatpush.msra.mxu0 %v625
    %750 = vmatmul.f32.gmra.mxu0 %v620
    %v751 = vpop.f32.mrf.mxu0
    %v752 = vadd.f32 %v691, %v751
    %753 = vdwg.mxu0
    %754 = vmatpush.msra.mxu0 %v687
    %755 = vmatpush.msra.mxu0 %v685
    %756 = vmatpush.msra.mxu0 %v683
    %757 = vmatpush.msra.mxu0 %v681
    %758 = vmatpush.msra.mxu0 %v679
    %759 = vmatpush.msra.mxu0 %v677
    %760 = vmatpush.msra.mxu0 %v675
    %761 = vmatpush.msra.mxu0 %v673
    %762 = vmatpush.msra.mxu0 %v671
    %763 = vmatpush.msra.mxu0 %v669
    %764 = vmatpush.msra.mxu0 %v667
    %765 = vmatpush.msra.mxu0 %v665
    %766 = vmatpush.msra.mxu0 %v663
    %767 = vmatpush.msra.mxu0 %v661
    %768 = vmatpush.msra.mxu0 %v659
    %769 = vmatpush.msra.mxu0 %v657
    %770 = vmatmul.f32.gmra.mxu0 %v623
    %v771 = vpop.f32.mrf.mxu0
    %v772 = vadd.f32 %v752, %v771
    %773 = vdwg.mxu0
    %vm774 = vcmp.ge.f32.partialorder %v732, 0.0
    %vm775 = vcmp.ge.f32.partialorder %v772, 0.0
    %v776 = vmul.f32 %v732, 0.1
    %v777 = vmul.f32 %v772, 0.1
    %v778 = vsel %vm774, %v732, %v776
    %v779 = vsel %vm775, %v772, %v777
    %v780 = vld [vmem:[#allocation5] sm:$0xff]
    %v781 = vld [vmem:[#allocation5 + $0x8] sm:$0xff]
    %v782 = vld [vmem:[#allocation5 + $0x10] sm:$0xff]
    %v783 = vld [vmem:[#allocation5 + $0x18] sm:$0xff]
    %v784 = vld [vmem:[#allocation5 + $0x20] sm:$0xff]
    %v785 = vld [vmem:[#allocation5 + $0x28] sm:$0xff]
    %v786 = vld [vmem:[#allocation5 + $0x30] sm:$0xff]
    %v787 = vld [vmem:[#allocation5 + $0x38] sm:$0xff]
    %v788 = vld [vmem:[#allocation5 + $0x40] sm:$0xff]
    %v789 = vld [vmem:[#allocation5 + $0x48] sm:$0xff]
    %v790 = vld [vmem:[#allocation5 + $0x50] sm:$0xff]
    %v791 = vld [vmem:[#allocation5 + $0x58] sm:$0xff]
    %v792 = vld [vmem:[#allocation5 + $0x60] sm:$0xff]
    %v793 = vld [vmem:[#allocation5 + $0x68] sm:$0xff]
    %v794 = vld [vmem:[#allocation5 + $0x70] sm:$0xff]
    %v795 = vld [vmem:[#allocation5 + $0x78] sm:$0xff]
    %v796 = vld [vmem:[#allocation5 + $0x80] sm:$0xff]
    %v797 = vld [vmem:[#allocation5 + $0x88] sm:$0xff]
    %v798 = vld [vmem:[#allocation5 + $0x90] sm:$0xff]
    %v799 = vld [vmem:[#allocation5 + $0x98] sm:$0xff]
    %v800 = vld [vmem:[#allocation5 + $0xa0] sm:$0xff]
    %v801 = vld [vmem:[#allocation5 + $0xa8] sm:$0xff]
    %v802 = vld [vmem:[#allocation5 + $0xb0] sm:$0xff]
    %v803 = vld [vmem:[#allocation5 + $0xb8] sm:$0xff]
    %v804 = vld [vmem:[#allocation5 + $0xc0] sm:$0xff]
    %v805 = vld [vmem:[#allocation5 + $0xc8] sm:$0xff]
    %v806 = vld [vmem:[#allocation5 + $0xd0] sm:$0xff]
    %v807 = vld [vmem:[#allocation5 + $0xd8] sm:$0xff]
    %v808 = vld [vmem:[#allocation5 + $0xe0] sm:$0xff]
    %v809 = vld [vmem:[#allocation5 + $0xe8] sm:$0xff]
    %v810 = vld [vmem:[#allocation5 + $0xf0] sm:$0xff]
    %v811 = vld [vmem:[#allocation5 + $0xf8] sm:$0xff]
    %v812 = vld [vmem:[%s8] sm:$0x1]
    %v814 = vperm.slane %v812, 0
    %816 = vmatpush.msra.mxu0 %v795
    %817 = vmatpush.msra.mxu0 %v794
    %818 = vmatpush.msra.mxu0 %v793
    %819 = vmatpush.msra.mxu0 %v792
    %820 = vmatpush.msra.mxu0 %v791
    %821 = vmatpush.msra.mxu0 %v790
    %822 = vmatpush.msra.mxu0 %v789
    %823 = vmatpush.msra.mxu0 %v788
    %824 = vmatpush.msra.mxu0 %v787
    %825 = vmatpush.msra.mxu0 %v786
    %826 = vmatpush.msra.mxu0 %v785
    %827 = vmatpush.msra.mxu0 %v784
    %828 = vmatpush.msra.mxu0 %v783
    %829 = vmatpush.msra.mxu0 %v782
    %830 = vmatpush.msra.mxu0 %v781
    %831 = vmatpush.msra.mxu0 %v780
    %832 = vmatmul.f32.gmra.mxu0 %v778
    %v833 = vpop.f32.mrf.mxu0
    %v834 = vadd.f32 %v814, %v833
    %835 = vdwg.mxu0
    %836 = vmatpush.msra.mxu0 %v811
    %837 = vmatpush.msra.mxu0 %v810
    %838 = vmatpush.msra.mxu0 %v809
    %839 = vmatpush.msra.mxu0 %v808
    %840 = vmatpush.msra.mxu0 %v807
    %841 = vmatpush.msra.mxu0 %v806
    %842 = vmatpush.msra.mxu0 %v805
    %843 = vmatpush.msra.mxu0 %v804
    %844 = vmatpush.msra.mxu0 %v803
    %845 = vmatpush.msra.mxu0 %v802
    %846 = vmatpush.msra.mxu0 %v801
    %847 = vmatpush.msra.mxu0 %v800
    %848 = vmatpush.msra.mxu0 %v799
    %849 = vmatpush.msra.mxu0 %v798
    %850 = vmatpush.msra.mxu0 %v797
    %851 = vmatpush.msra.mxu0 %v796
    %852 = vmatmul.f32.gmra.mxu0 %v779
    %v853 = vpop.f32.mrf.mxu0
    %v854 = vadd.f32 %v834, %v853
    %855 = vdwg.mxu0
    %856 = vst [vmem:[#allocation7] sm:$0x3] %v854
    // Predicated region
    $region46: #{tpu_custom_call.1} parent=1 // pred_check
      _
    $region47: #{tpu_custom_call.1} parent=1 // pred_check_branch
      %858 = sbr.rel (0) target = $region49
    $region48: #{tpu_custom_call.1} parent=1 // pred_region
      %860 = vsyncadd [#allocation4], 0
      %s862 = sshll.u32 [#allocation7], 4
      %s863 = int_to_ptr.vmem [resolvable:$true] %s862
      %s864 = sshll.u32 %s9, 4
      %s865 = int_to_ptr.hbm [resolvable:$true] %s864
      %867 = dma.vmem_to_hbm [thread:$0]  %s863, 32, %s865, [#allocation4]
    $region49: #{tpu_custom_call.1} parent=1 // pred_fallthru
      _
    // Predicated region
    $region50: #{tpu_custom_call.1} parent=1 // pred_check
      _
    $region51: #{tpu_custom_call.1} parent=1 // pred_check_branch
      %869 = sbr.rel (0) target = $region53
    $region52: #{tpu_custom_call.1} parent=1 // pred_region
      %871 = dma.done [#allocation4], 32
    $region53: #{tpu_custom_call.1} parent=1 // pred_fallthru
      _
    %872 = vsyncpa [#allocation3], 1
    %873 = vsyncpa [#allocation6], 1
    %874 = vsyncpa [#allocation4], 1

</llo_original>
